<compile_context>
chip_gen: v5e
topology: v5e:2x2
jax: 0.10.0
libtpu: 0.0.40
codegen_flags: <defaults>
</compile_context>

<pallas_src>
import functools

import jax
import jax.numpy as jnp
import numpy as np
from jax.experimental import pallas as pl
from jax.experimental.pallas import tpu as pltpu

BN_EPS = 1e-5
VMEM_LIMIT_BYTES = 32 * 1024 * 1024  # never assume 128 MiB (v7x: 64 MiB physical)


def _conv_stats_kernel(p_ref, w_ref, b_ref, y_ref, sum_ref, ssq_ref,
                       *, m_real, tile_m):
    """Phase 1: conv (single folded matmul) + bias + per-channel batch stats.

    p_ref:   (KC, TM)    bf16  im2col tile, KC = KH*KW*Cin, lanes = M tile
    w_ref:   (Cout, KC)  bf16  folded conv weight
    b_ref:   (Cout, 1)   f32   conv bias
    y_ref:   (Cout, TM)  f32   conv+bias tile (lane-dense store)
    sum_ref: (Cout, 1)   f32   resident accumulator: sum_m y
    ssq_ref: (Cout, 1)   f32   resident accumulator: sum_m y^2
    """
    i = pl.program_id(0)

    @pl.when(i == 0)
    def _init():
        sum_ref[...] = jnp.zeros_like(sum_ref)
        ssq_ref[...] = jnp.zeros_like(ssq_ref)

    # One MXU matmul with contraction depth KH*KW*Cin (tap-folded).
    y = jnp.dot(w_ref[...], p_ref[...], preferred_element_type=jnp.float32)
    y = y + b_ref[...]  # conv bias (broadcast over lanes)
    y_ref[...] = y

    # Batch statistics; mask out the zero-padded M columns of the last tile.
    col = jax.lax.broadcasted_iota(jnp.int32, y.shape, 1) + i * tile_m
    yv = jnp.where(col < m_real, y, 0.0)
    sum_ref[...] += jnp.sum(yv, axis=1, keepdims=True)
    ssq_ref[...] += jnp.sum(yv * yv, axis=1, keepdims=True)


def _bn_relu_kernel(y_ref, sum_ref, ssq_ref, gamma_ref, beta_ref, o_ref,
                    *, m_real):
    """Phase 2: finish training-mode BatchNorm2d (biased var) + affine + ReLU."""
    inv_m = 1.0 / float(m_real)
    mean = sum_ref[...] * inv_m
    # One-pass variance E[x^2] - E[x]^2; f32 accumulation, clamp tiny negatives.
    var = jnp.maximum(ssq_ref[...] * inv_m - mean * mean, 0.0)
    scale = gamma_ref[...] * jax.lax.rsqrt(var + BN_EPS)
    shift = beta_ref[...] - mean * scale
    o_ref[...] = jnp.maximum(y_ref[...] * scale + shift, 0.0)


def _conv_block_impl(x_nchw, w_oihw, bias, gamma, beta,
                     *, stride, padding, tile_m):
    """ConvBlock forward (Conv2d -> BatchNorm2d(train) -> ReLU). NCHW in/out."""
    assert tile_m % 128 == 0
    n, cin, h, w = x_nchw.shape
    cout, cin_w, kh, kw = w_oihw.shape
    assert cin == cin_w

    x = jnp.transpose(x_nchw, (0, 2, 3, 1))  # -> NHWC (glue)
    if padding > 0:  # 'zeros' padding mode
        x = jnp.pad(x, ((0, 0), (padding, padding), (padding, padding), (0, 0)))
        h += 2 * padding
        w += 2 * padding

    oh = (h - kh) // stride + 1
    ow = (w - kw) // stride + 1
    m = n * oh * ow
    kc = kh * kw * cin

    # im2col with the contraction on sublanes and M on lanes (bf16 for the MXU).
    slabs = []
    for ih in range(kh):
        for iw in range(kw):
            sl = x[:, ih:ih + stride * oh:stride, iw:iw + stride * ow:stride, :]
            slabs.append(jnp.transpose(sl, (3, 0, 1, 2)).reshape(cin, m))
    patches_t = jnp.concatenate(slabs, axis=0).astype(jnp.bfloat16)  # (KC, M)

    n_tiles = -(-m // tile_m)
    m_pad = n_tiles * tile_m
    if m_pad != m:
        patches_t = jnp.pad(patches_t, ((0, 0), (0, m_pad - m)))

    w_t = jnp.transpose(w_oihw, (0, 2, 3, 1)).reshape(cout, kc).astype(jnp.bfloat16)
    b_col = bias.reshape(cout, 1).astype(jnp.float32)
    g_col = gamma.reshape(cout, 1).astype(jnp.float32)
    be_col = beta.reshape(cout, 1).astype(jnp.float32)

    small_spec = pl.BlockSpec((cout, 1), lambda i: (0, 0))       # resident per-channel vectors
    ytile_spec = pl.BlockSpec((cout, tile_m), lambda i: (0, i))  # lane-dense M tiles

    # ---------------- Phase 1: conv + bias + per-channel sum / sumsq ----------------
    p1_cost = pl.CostEstimate(
        flops=2 * m_pad * kc * cout,
        transcendentals=0,
        bytes_accessed=(kc * m_pad + kc * cout) * 2 + (cout * m_pad + 3 * cout) * 4)
    y_flat, ch_sum, ch_ssq = pl.pallas_call(
        functools.partial(_conv_stats_kernel, m_real=m, tile_m=tile_m),
        out_shape=(jax.ShapeDtypeStruct((cout, m_pad), jnp.float32),
                   jax.ShapeDtypeStruct((cout, 1), jnp.float32),
                   jax.ShapeDtypeStruct((cout, 1), jnp.float32)),
        grid_spec=pltpu.PrefetchScalarGridSpec(
            num_scalar_prefetch=0,
            grid=(n_tiles,),
            in_specs=[pl.BlockSpec((kc, tile_m), lambda i: (0, i)),
                      pl.BlockSpec((cout, kc), lambda i: (0, 0)),
                      small_spec],
            out_specs=[ytile_spec, small_spec, small_spec]),
        compiler_params=pltpu.CompilerParams(
            dimension_semantics=("arbitrary",),  # stats accumulate across M tiles
            vmem_limit_bytes=VMEM_LIMIT_BYTES),
        cost_estimate=p1_cost,
    )(patches_t, w_t, b_col)

    # ------------- Phase 2: BatchNorm (from sums) + ReLU, in place over y -------------
    p2_cost = pl.CostEstimate(
        flops=4 * m_pad * cout,
        transcendentals=n_tiles * cout,
        bytes_accessed=2 * cout * m_pad * 4 + 4 * cout * 4)
    out_t = pl.pallas_call(
        functools.partial(_bn_relu_kernel, m_real=m),
        out_shape=jax.ShapeDtypeStruct((cout, m_pad), jnp.float32),
        grid_spec=pltpu.PrefetchScalarGridSpec(
            num_scalar_prefetch=0,
            grid=(n_tiles,),
            in_specs=[ytile_spec, small_spec, small_spec, small_spec, small_spec],
            out_specs=ytile_spec),
        compiler_params=pltpu.CompilerParams(
            dimension_semantics=("parallel",),  # independent tiles (v7x: 2 TCs)
            vmem_limit_bytes=VMEM_LIMIT_BYTES),
        cost_estimate=p2_cost,
        input_output_aliases={0: 0},  # overwrite the phase-1 buffer in place
    )(y_flat, ch_sum, ch_ssq, g_col, be_col)

    # TODO(synk): running_mean/running_var updates and the Dropout2d / residual
    # branches (inactive at module defaults) are not produced by these kernels.
    out = out_t[:, :m].reshape(cout, n, oh, ow)
    return jnp.transpose(out, (1, 0, 2, 3))  # back to NCHW


conv_block = jax.jit(_conv_block_impl,
                     static_argnames=("stride", "padding", "tile_m"))


def conv_block_ref(x_nchw, w_oihw, bias, gamma, beta, *, stride=1, padding=0):
    """Pure-JAX f32 reference for validation."""
    y = jax.lax.conv_general_dilated(
        x_nchw, w_oihw, window_strides=(stride, stride),
        padding=[(padding, padding), (padding, padding)],
        dimension_numbers=("NCHW", "OIHW", "NCHW"),
        precision=jax.lax.Precision.HIGHEST)
    y = y + bias[None, :, None, None]
    mean = jnp.mean(y, axis=(0, 2, 3), keepdims=True)
    var = jnp.mean(jnp.square(y - mean), axis=(0, 2, 3), keepdims=True)
    y = (y - mean) * jax.lax.rsqrt(var + BN_EPS)
    y = y * gamma[None, :, None, None] + beta[None, :, None, None]
    return jnp.maximum(y, 0.0)


if __name__ == "__main__":
    # ConvBlock(in_channels=4, out_channels=8) with defaults:
    # kernel_size=3, stride=1, padding=0, bias=True, use_bn=True, activation=relu.
    N, CIN, H, W = 2, 4, 16, 16
    COUT, K = 8, 3
    STRIDE, PADDING = 1, 0

    key = jax.random.PRNGKey(0)
    kx, kw_, kb, kg, kbeta = jax.random.split(key, 5)

    x = jax.random.normal(kx, (N, CIN, H, W), dtype=jnp.float32)
    fan_in = CIN * K * K
    w = jax.random.normal(kw_, (COUT, CIN, K, K), dtype=jnp.float32) / np.sqrt(fan_in)
    b = 0.1 * jax.random.normal(kb, (COUT,), dtype=jnp.float32)
    gamma = 1.0 + 0.1 * jax.random.normal(kg, (COUT,), dtype=jnp.float32)
    beta = 0.05 * jax.random.normal(kbeta, (COUT,), dtype=jnp.float32)

    # tile_m=128 so this toy M (= 2*14*14 = 392 -> padded 512) exercises a
    # multi-step grid; production sizes would use 512-1024 lane tiles.
    out = conv_block(x, w, b, gamma, beta,
                     stride=STRIDE, padding=PADDING, tile_m=128)
    out = jax.block_until_ready(out)

    ref = conv_block_ref(x, w, b, gamma, beta, stride=STRIDE, padding=PADDING)
    ref = jax.block_until_ready(ref)

    assert out.shape == (N, COUT, H - K + 1, W - K + 1), out.shape
    # bf16 MXU operands -> loosen the tolerance vs. the f32 HIGHEST reference.
    max_err = float(jnp.max(jnp.abs(out - ref)))
    assert np.isfinite(max_err) and max_err < 5e-2, f"max_err={max_err}"

    print("KERNEL_OK")
</pallas_src>

<mosaic_0001>
module attributes {stable_mosaic.version = 11 : i64} {
  func.func @_conv_stats_kernel(%arg0: i32, %arg1: memref<36x128xbf16, #tpu.memory_space<vmem>>, %arg2: memref<8x36xbf16, #tpu.memory_space<vmem>>, %arg3: memref<8x1xf32, #tpu.memory_space<vmem>>, %arg4: memref<8x128xf32, #tpu.memory_space<vmem>>, %arg5: memref<8x1xf32, #tpu.memory_space<vmem>>, %arg6: memref<8x1xf32, #tpu.memory_space<vmem>>) attributes {dimension_semantics = [#tpu.dimension_semantics<arbitrary>], iteration_bounds = array<i64: 4>, scalar_prefetch = 0 : i64, scratch_operands = 0 : i64, tpu.core_type = #tpu.core_type<tc>, window_params = [{transform_indices = @transform_0, window_bounds = array<i64: 36, 128>}, {pipeline_mode = #tpu.pipeline_mode<synchronous>, transform_indices = @transform_1, window_bounds = array<i64: 8, 36>}, {pipeline_mode = #tpu.pipeline_mode<synchronous>, transform_indices = @transform_2, window_bounds = array<i64: 8, 1>}, {transform_indices = @transform_3, window_bounds = array<i64: 8, 128>}, {pipeline_mode = #tpu.pipeline_mode<synchronous>, transform_indices = @transform_4, window_bounds = array<i64: 8, 1>}, {pipeline_mode = #tpu.pipeline_mode<synchronous>, transform_indices = @transform_5, window_bounds = array<i64: 8, 1>}]} {
    %c0_i32 = arith.constant 0 : i32
    %0 = arith.cmpi eq, %arg0, %c0_i32 : i32
    %1 = arith.extui %0 : i1 to i32
    %c0_i32_0 = arith.constant 0 : i32
    %2 = arith.cmpi ne, %1, %c0_i32_0 : i32
    scf.if %2 {
      %cst_19 = arith.constant 0.000000e+00 : f32
      %29 = vector.broadcast %cst_19 : f32 to vector<8x1xf32>
      %c0_20 = arith.constant 0 : index
      %c0_21 = arith.constant 0 : index
      %30 = vector.load %arg5[%c0_20, %c0_21] : memref<8x1xf32, #tpu.memory_space<vmem>>, vector<8x1xf32>
      tpu.vector_store %arg5[%c0_20, %c0_21], %29 {strides = array<i32>} : memref<8x1xf32, #tpu.memory_space<vmem>>, vector<8x1xf32>,
      %cst_22 = arith.constant 0.000000e+00 : f32
      %31 = vector.broadcast %cst_22 : f32 to vector<8x1xf32>
      %c0_23 = arith.constant 0 : index
      %c0_24 = arith.constant 0 : index
      %32 = vector.load %arg6[%c0_23, %c0_24] : memref<8x1xf32, #tpu.memory_space<vmem>>, vector<8x1xf32>
      tpu.vector_store %arg6[%c0_23, %c0_24], %31 {strides = array<i32>} : memref<8x1xf32, #tpu.memory_space<vmem>>, vector<8x1xf32>,
    } else {
    }
    %c0 = arith.constant 0 : index
    %c0_1 = arith.constant 0 : index
    %3 = vector.load %arg2[%c0, %c0_1] : memref<8x36xbf16, #tpu.memory_space<vmem>>, vector<8x36xbf16>
    %c0_2 = arith.constant 0 : index
    %c0_3 = arith.constant 0 : index
    %4 = vector.load %arg1[%c0_2, %c0_3] : memref<36x128xbf16, #tpu.memory_space<vmem>>, vector<36x128xbf16>
    %cst = arith.constant dense<0.000000e+00> : vector<8x128xf32>
    %5 = tpu.matmul %3, %4, %cst {dimension_numbers = #tpu.dot_dimension_numbers<[1], [0], [0], [1], [0, 0, 1, 1], [], []>} : vector<8x36xbf16>, vector<36x128xbf16>, vector<8x128xf32> -> vector<8x128xf32>
    %c0_4 = arith.constant 0 : index
    %c0_5 = arith.constant 0 : index
    %6 = vector.load %arg3[%c0_4, %c0_5] : memref<8x1xf32, #tpu.memory_space<vmem>>, vector<8x1xf32>
    %7 = vector.broadcast %6 : vector<8x1xf32> to vector<8x128xf32>
    %8 = arith.addf %5, %7 : vector<8x128xf32>
    %c0_6 = arith.constant 0 : index
    %c0_7 = arith.constant 0 : index
    %9 = vector.load %arg4[%c0_6, %c0_7] : memref<8x128xf32, #tpu.memory_space<vmem>>, vector<8x128xf32>
    tpu.vector_store %arg4[%c0_6, %c0_7], %8 {strides = array<i32>} : memref<8x128xf32, #tpu.memory_space<vmem>>, vector<8x128xf32>,
    %10 = tpu.iota {dimensions = array<i32: 1>} : vector<8x128xi32>
    %c128_i32 = arith.constant 128 : i32
    %11 = arith.muli %arg0, %c128_i32 : i32
    %12 = vector.broadcast %11 : i32 to vector<8x128xi32>
    %13 = arith.addi %10, %12 : vector<8x128xi32>
    %c392_i32 = arith.constant 392 : i32
    %14 = vector.broadcast %c392_i32 : i32 to vector<8x128xi32>
    %15 = arith.cmpi slt, %13, %14 : vector<8x128xi32>
    %cst_8 = arith.constant 0.000000e+00 : f32
    %16 = vector.broadcast %cst_8 : f32 to vector<8x128xf32>
    %17 = arith.select %15, %8, %16 : vector<8x128xi1>, vector<8x128xf32>
    %c0_9 = arith.constant 0 : index
    %c0_10 = arith.constant 0 : index
    %18 = vector.load %arg5[%c0_9, %c0_10] : memref<8x1xf32, #tpu.memory_space<vmem>>, vector<8x1xf32>
    %cst_11 = arith.constant dense<0.000000e+00> : vector<8xf32>
    %19 = vector.multi_reduction <add>, %17, %cst_11 [1] : vector<8x128xf32> to vector<8xf32>
    %20 = vector.shape_cast %19 : vector<8xf32> to vector<8x1xf32>
    %21 = arith.addf %18, %20 : vector<8x1xf32>
    %c0_12 = arith.constant 0 : index
    %c0_13 = arith.constant 0 : index
    %22 = vector.load %arg5[%c0_12, %c0_13] : memref<8x1xf32, #tpu.memory_space<vmem>>, vector<8x1xf32>
    tpu.vector_store %arg5[%c0_12, %c0_13], %21 {strides = array<i32>} : memref<8x1xf32, #tpu.memory_space<vmem>>, vector<8x1xf32>,
    %c0_14 = arith.constant 0 : index
    %c0_15 = arith.constant 0 : index
    %23 = vector.load %arg6[%c0_14, %c0_15] : memref<8x1xf32, #tpu.memory_space<vmem>>, vector<8x1xf32>
    %24 = arith.mulf %17, %17 : vector<8x128xf32>
    %cst_16 = arith.constant dense<0.000000e+00> : vector<8xf32>
    %25 = vector.multi_reduction <add>, %24, %cst_16 [1] : vector<8x128xf32> to vector<8xf32>
    %26 = vector.shape_cast %25 : vector<8xf32> to vector<8x1xf32>
    %27 = arith.addf %23, %26 : vector<8x1xf32>
    %c0_17 = arith.constant 0 : index
    %c0_18 = arith.constant 0 : index
    %28 = vector.load %arg6[%c0_17, %c0_18] : memref<8x1xf32, #tpu.memory_space<vmem>>, vector<8x1xf32>
    tpu.vector_store %arg6[%c0_17, %c0_18], %27 {strides = array<i32>} : memref<8x1xf32, #tpu.memory_space<vmem>>, vector<8x1xf32>,
    return
  }
  func.func @transform_0(%arg0: i32) -> (i32, i32) {
    %c0_i32 = arith.constant 0 : i32
    %c0_i32_0 = arith.constant 0 : i32
    return %c0_i32, %arg0 : i32, i32
  }
  func.func @transform_1(%arg0: i32) -> (i32, i32) {
    %c0_i32 = arith.constant 0 : i32
    %c0_i32_0 = arith.constant 0 : i32
    %c0_i32_1 = arith.constant 0 : i32
    return %c0_i32, %c0_i32_0 : i32, i32
  }
  func.func @transform_2(%arg0: i32) -> (i32, i32) {
    %c0_i32 = arith.constant 0 : i32
    %c0_i32_0 = arith.constant 0 : i32
    %c0_i32_1 = arith.constant 0 : i32
    return %c0_i32, %c0_i32_0 : i32, i32
  }
  func.func @transform_3(%arg0: i32) -> (i32, i32) {
    %c0_i32 = arith.constant 0 : i32
    %c0_i32_0 = arith.constant 0 : i32
    return %c0_i32, %arg0 : i32, i32
  }
  func.func @transform_4(%arg0: i32) -> (i32, i32) {
    %c0_i32 = arith.constant 0 : i32
    %c0_i32_0 = arith.constant 0 : i32
    %c0_i32_1 = arith.constant 0 : i32
    return %c0_i32, %c0_i32_0 : i32, i32
  }
  func.func @transform_5(%arg0: i32) -> (i32, i32) {
    %c0_i32 = arith.constant 0 : i32
    %c0_i32_0 = arith.constant 0 : i32
    %c0_i32_1 = arith.constant 0 : i32
    return %c0_i32, %c0_i32_0 : i32, i32
  }
}

module attributes {stable_mosaic.version = 11 : i64} {
  func.func @_bn_relu_kernel(%arg0: i32, %arg1: memref<8x128xf32, #tpu.memory_space<vmem>>, %arg2: memref<8x1xf32, #tpu.memory_space<vmem>>, %arg3: memref<8x1xf32, #tpu.memory_space<vmem>>, %arg4: memref<8x1xf32, #tpu.memory_space<vmem>>, %arg5: memref<8x1xf32, #tpu.memory_space<vmem>>, %arg6: memref<8x128xf32, #tpu.memory_space<vmem>>) attributes {dimension_semantics = [#tpu.dimension_semantics<parallel>], iteration_bounds = array<i64: 4>, scalar_prefetch = 0 : i64, scratch_operands = 0 : i64, tpu.core_type = #tpu.core_type<tc>, window_params = [{transform_indices = @transform_0, window_bounds = array<i64: 8, 128>}, {pipeline_mode = #tpu.pipeline_mode<synchronous>, transform_indices = @transform_1, window_bounds = array<i64: 8, 1>}, {pipeline_mode = #tpu.pipeline_mode<synchronous>, transform_indices = @transform_2, window_bounds = array<i64: 8, 1>}, {pipeline_mode = #tpu.pipeline_mode<synchronous>, transform_indices = @transform_3, window_bounds = array<i64: 8, 1>}, {pipeline_mode = #tpu.pipeline_mode<synchronous>, transform_indices = @transform_4, window_bounds = array<i64: 8, 1>}, {transform_indices = @transform_5, window_bounds = array<i64: 8, 128>}]} {
    %c0 = arith.constant 0 : index
    %c0_0 = arith.constant 0 : index
    %0 = vector.load %arg2[%c0, %c0_0] : memref<8x1xf32, #tpu.memory_space<vmem>>, vector<8x1xf32>
    %cst = arith.constant 0.00255102036 : f32
    %1 = vector.broadcast %cst : f32 to vector<8x1xf32>
    %2 = arith.mulf %0, %1 : vector<8x1xf32>
    %c0_1 = arith.constant 0 : index
    %c0_2 = arith.constant 0 : index
    %3 = vector.load %arg3[%c0_1, %c0_2] : memref<8x1xf32, #tpu.memory_space<vmem>>, vector<8x1xf32>
    %cst_3 = arith.constant 0.00255102036 : f32
    %4 = vector.broadcast %cst_3 : f32 to vector<8x1xf32>
    %5 = arith.mulf %3, %4 : vector<8x1xf32>
    %6 = arith.mulf %2, %2 : vector<8x1xf32>
    %7 = arith.subf %5, %6 : vector<8x1xf32>
    %cst_4 = arith.constant 0.000000e+00 : f32
    %8 = vector.broadcast %cst_4 : f32 to vector<8x1xf32>
    %9 = arith.maximumf %7, %8 : vector<8x1xf32>
    %c0_5 = arith.constant 0 : index
    %c0_6 = arith.constant 0 : index
    %10 = vector.load %arg4[%c0_5, %c0_6] : memref<8x1xf32, #tpu.memory_space<vmem>>, vector<8x1xf32>
    %cst_7 = arith.constant 9.99999974E-6 : f32
    %11 = vector.broadcast %cst_7 : f32 to vector<8x1xf32>
    %12 = arith.addf %9, %11 : vector<8x1xf32>
    %13 = math.rsqrt %12 : vector<8x1xf32>
    %14 = arith.mulf %10, %13 : vector<8x1xf32>
    %c0_8 = arith.constant 0 : index
    %c0_9 = arith.constant 0 : index
    %15 = vector.load %arg5[%c0_8, %c0_9] : memref<8x1xf32, #tpu.memory_space<vmem>>, vector<8x1xf32>
    %16 = arith.mulf %2, %14 : vector<8x1xf32>
    %17 = arith.subf %15, %16 : vector<8x1xf32>
    %c0_10 = arith.constant 0 : index
    %c0_11 = arith.constant 0 : index
    %18 = vector.load %arg1[%c0_10, %c0_11] : memref<8x128xf32, #tpu.memory_space<vmem>>, vector<8x128xf32>
    %19 = vector.broadcast %14 : vector<8x1xf32> to vector<8x128xf32>
    %20 = arith.mulf %18, %19 : vector<8x128xf32>
    %21 = vector.broadcast %17 : vector<8x1xf32> to vector<8x128xf32>
    %22 = arith.addf %20, %21 : vector<8x128xf32>
    %cst_12 = arith.constant 0.000000e+00 : f32
    %23 = vector.broadcast %cst_12 : f32 to vector<8x128xf32>
    %24 = arith.maximumf %22, %23 : vector<8x128xf32>
    %c0_13 = arith.constant 0 : index
    %c0_14 = arith.constant 0 : index
    %25 = vector.load %arg6[%c0_13, %c0_14] : memref<8x128xf32, #tpu.memory_space<vmem>>, vector<8x128xf32>
    tpu.vector_store %arg6[%c0_13, %c0_14], %24 {strides = array<i32>} : memref<8x128xf32, #tpu.memory_space<vmem>>, vector<8x128xf32>,
    return
  }
  func.func @transform_0(%arg0: i32) -> (i32, i32) {
    %c0_i32 = arith.constant 0 : i32
    %c0_i32_0 = arith.constant 0 : i32
    return %c0_i32, %arg0 : i32, i32
  }
  func.func @transform_1(%arg0: i32) -> (i32, i32) {
    %c0_i32 = arith.constant 0 : i32
    %c0_i32_0 = arith.constant 0 : i32
    %c0_i32_1 = arith.constant 0 : i32
    return %c0_i32, %c0_i32_0 : i32, i32
  }
  func.func @transform_2(%arg0: i32) -> (i32, i32) {
    %c0_i32 = arith.constant 0 : i32
    %c0_i32_0 = arith.constant 0 : i32
    %c0_i32_1 = arith.constant 0 : i32
    return %c0_i32, %c0_i32_0 : i32, i32
  }
  func.func @transform_3(%arg0: i32) -> (i32, i32) {
    %c0_i32 = arith.constant 0 : i32
    %c0_i32_0 = arith.constant 0 : i32
    %c0_i32_1 = arith.constant 0 : i32
    return %c0_i32, %c0_i32_0 : i32, i32
  }
  func.func @transform_4(%arg0: i32) -> (i32, i32) {
    %c0_i32 = arith.constant 0 : i32
    %c0_i32_0 = arith.constant 0 : i32
    %c0_i32_1 = arith.constant 0 : i32
    return %c0_i32, %c0_i32_0 : i32, i32
  }
  func.func @transform_5(%arg0: i32) -> (i32, i32) {
    %c0_i32 = arith.constant 0 : i32
    %c0_i32_0 = arith.constant 0 : i32
    return %c0_i32, %arg0 : i32, i32
  }
}

</mosaic_0001>

<llo_original>
// kernel: _conv_block_impl.2
$region0: #{_conv_block_impl.2}
  #allocation0 [shape = 'u32[]', space=smem, size = 0x4, offset = 0x4, fixed_abs, tag = 'smem constant byte address 0x4 - core index']
  #allocation1 [shape = 'u32[72,128]{1,0:T(1,128)}', space=vmem, size = 0x9000, scoped, tag = 'internal scratch']
  %s0 = inlined_call_operand.vmem [shape: bf16[36,512], index: 0, kind: input, shape index: {}]
  %s1 = inlined_call_operand.vmem [shape: bf16[8,36], index: 1, kind: input, shape index: {}]
  %s2 = inlined_call_operand.vmem [shape: f32[8,1], index: 2, kind: input, shape index: {}]
  %s3 = inlined_call_operand.vmem [shape: f32[8,512], index: 3, kind: output, shape index: {0}]
  %s4 = inlined_call_operand.vmem [shape: f32[8,1], index: 4, kind: output, shape index: {1}]
  %s5 = inlined_call_operand.vmem [shape: f32[8,1], index: 5, kind: output, shape index: {2}]
  %6 = xla_tuple %s3, %s4, %s5
  %s7 = sld [smem:[#allocation0]]
  $region106: #{_conv_block_impl.2} parent=0
    _
  %s9 = ssub.s32 1, %s7
  %s10 = scalar_select 0, %s9, %s7
  $region1: #{_conv_block_impl.2} parent=0
    #allocation2 [shape = 'u8[20480]{0}', space=vmem, size = 0x5000, scoped, tag = 'input window, operand 0']
    loop: start=0, step=1, limit=6
    $region2: #{_conv_block_impl.2} parent=1 // loop_pre_header
      _
    $region3: #{_conv_block_impl.2} parent=1 // loop_header
      %s12 = sphi 0, %s16
      %p13 = scmp.ge.s32.totalorder %s12, 6
      %s22 = sphi 0, %s24
      %s25 = sphi 0, %s22
      %s26 = sphi 0, %s25
      %s42 = sphi 0, %s26
      %s46 = sphi 0, %s46
      %s48 = sphi 0, %s46
      %s49 = sphi 0, %s48
      %s63 = sphi 0, %s49
      %s67 = sphi 0, %s67
      %s69 = sphi 0, %s67
      %s70 = sphi 0, %s69
      %s84 = sphi 0, %s70
      %s90 = sphi 0, %s92
      %s93 = sphi 0, %s90
      %s94 = sphi 0, %s93
      %s110 = sphi 0, %s94
      %s114 = sphi 0, %s114
      %s116 = sphi 0, %s114
      %s117 = sphi 0, %s116
      %s131 = sphi 0, %s117
      %s135 = sphi 0, %s135
      %s137 = sphi 0, %s135
      %s138 = sphi 0, %s137
      %s152 = sphi 0, %s138
    $region4: #{_conv_block_impl.2} parent=1 // loop_header_branch
      %15 = sbr.rel (%p13) target = $region8
    $region5: #{_conv_block_impl.2} parent=1 // loop_body
      %s17 = ssub.s32 %s12, 1
      %s18 = ssub.s32 %s12, 2
      %s19 = sadd.s32 %s12, 1
      %s20 = ssub.s32 %s12, %s19
      %p21 = scmp.eq.s32.totalorder %s20, 0
      %s23 = sadd.s32 %s22, 1
      %s24 = scalar_select %p21, %s22, %s23
      %p27 = pneg %p21
      %p28 = scmp.eq.s32.totalorder %s12, 3
      %p29 = por %p27, %p28
      %p30 = scmp.ne.s32.totalorder %s22, %s25
      %p31 = scmp.eq.s32.totalorder %s12, 0
      %p32 = por %p30, %p31
      %p33 = scmp.ne.s32.totalorder %s22, %s25
      %p34 = scmp.eq.s32.totalorder %s17, 3
      %p35 = por %p33, %p34
      %p36 = scmp.ne.s32.totalorder %s25, %s26
      %p37 = scmp.eq.s32.totalorder %s17, 0
      %p38 = por %p36, %p37
      %p39 = scmp.ne.s32.totalorder %s25, %s26
      %p40 = scmp.eq.s32.totalorder %s18, 3
      %p41 = por %p39, %p40
      %p43 = scmp.ne.s32.totalorder %s26, %s42
      %p44 = scmp.eq.s32.totalorder %s18, 0
      %p45 = por %p43, %p44
      %s47 = sadd.s32 %s46, 1
      %p50 = scmp.eq.s32.totalorder %s12, 3
      %p51 = scmp.ne.s32.totalorder %s46, %s48
      %p52 = scmp.eq.s32.totalorder %s12, 0
      %p53 = por %p51, %p52
      %p54 = scmp.ne.s32.totalorder %s46, %s48
      %p55 = scmp.eq.s32.totalorder %s17, 3
      %p56 = por %p54, %p55
      %p57 = scmp.ne.s32.totalorder %s48, %s49
      %p58 = scmp.eq.s32.totalorder %s17, 0
      %p59 = por %p57, %p58
      %p60 = scmp.ne.s32.totalorder %s48, %s49
      %p61 = scmp.eq.s32.totalorder %s18, 3
      %p62 = por %p60, %p61
      %p64 = scmp.ne.s32.totalorder %s49, %s63
      %p65 = scmp.eq.s32.totalorder %s18, 0
      %p66 = por %p64, %p65
      %s68 = sadd.s32 %s67, 1
      %p71 = scmp.eq.s32.totalorder %s12, 3
      %p72 = scmp.ne.s32.totalorder %s67, %s69
      %p73 = scmp.eq.s32.totalorder %s12, 0
      %p74 = por %p72, %p73
      %p75 = scmp.ne.s32.totalorder %s67, %s69
      %p76 = scmp.eq.s32.totalorder %s17, 3
      %p77 = por %p75, %p76
      %p78 = scmp.ne.s32.totalorder %s69, %s70
      %p79 = scmp.eq.s32.totalorder %s17, 0
      %p80 = por %p78, %p79
      %p81 = scmp.ne.s32.totalorder %s69, %s70
      %p82 = scmp.eq.s32.totalorder %s18, 3
      %p83 = por %p81, %p82
      %p85 = scmp.ne.s32.totalorder %s70, %s84
      %p86 = scmp.eq.s32.totalorder %s18, 0
      %p87 = por %p85, %p86
      %s88 = ssub.s32 %s12, %s19
      %p89 = scmp.eq.s32.totalorder %s88, 0
      %s91 = sadd.s32 %s90, 1
      %s92 = scalar_select %p89, %s90, %s91
      %p95 = pneg %p89
      %p96 = scmp.eq.s32.totalorder %s12, 3
      %p97 = por %p95, %p96
      %p98 = scmp.ne.s32.totalorder %s90, %s93
      %p99 = scmp.eq.s32.totalorder %s12, 0
      %p100 = por %p98, %p99
      %p101 = scmp.ne.s32.totalorder %s90, %s93
      %p102 = scmp.eq.s32.totalorder %s17, 3
      %p103 = por %p101, %p102
      %p104 = scmp.ne.s32.totalorder %s93, %s94
      %p105 = scmp.eq.s32.totalorder %s17, 0
      %p106 = por %p104, %p105
      %p107 = scmp.ne.s32.totalorder %s93, %s94
      %p108 = scmp.eq.s32.totalorder %s18, 3
      %p109 = por %p107, %p108
      %p111 = scmp.ne.s32.totalorder %s94, %s110
      %p112 = scmp.eq.s32.totalorder %s18, 0
      %p113 = por %p111, %p112
      %s115 = sadd.s32 %s114, 1
      %p118 = scmp.eq.s32.totalorder %s12, 3
      %p119 = scmp.ne.s32.totalorder %s114, %s116
      %p120 = scmp.eq.s32.totalorder %s12, 0
      %p121 = por %p119, %p120
      %p122 = scmp.ne.s32.totalorder %s114, %s116
      %p123 = scmp.eq.s32.totalorder %s17, 3
      %p124 = por %p122, %p123
      %p125 = scmp.ne.s32.totalorder %s116, %s117
      %p126 = scmp.eq.s32.totalorder %s17, 0
      %p127 = por %p125, %p126
      %p128 = scmp.ne.s32.totalorder %s116, %s117
      %p129 = scmp.eq.s32.totalorder %s18, 3
      %p130 = por %p128, %p129
      %p132 = scmp.ne.s32.totalorder %s117, %s131
      %p133 = scmp.eq.s32.totalorder %s18, 0
      %p134 = por %p132, %p133
      %s136 = sadd.s32 %s135, 1
      %p139 = scmp.eq.s32.totalorder %s12, 3
      %p140 = scmp.ne.s32.totalorder %s135, %s137
      %p141 = scmp.eq.s32.totalorder %s12, 0
      %p142 = por %p140, %p141
      %p143 = scmp.ne.s32.totalorder %s135, %s137
      %p144 = scmp.eq.s32.totalorder %s17, 3
      %p145 = por %p143, %p144
      %p146 = scmp.ne.s32.totalorder %s137, %s138
      %p147 = scmp.eq.s32.totalorder %s17, 0
      %p148 = por %p146, %p147
      %p149 = scmp.ne.s32.totalorder %s137, %s138
      %p150 = scmp.eq.s32.totalorder %s18, 3
      %p151 = por %p149, %p150
      %p153 = scmp.ne.s32.totalorder %s138, %s152
      %p154 = scmp.eq.s32.totalorder %s18, 0
      %p155 = por %p153, %p154
      %p156 = scmp.le.s32.totalorder 1, %s12
      %p157 = scmp.lt.s32.totalorder %s12, 5
      %p158 = pnand %p156, %p157
      %p159 = pneg %p158
      // Predicated region
      $region9: #{_conv_block_impl.2} parent=5 // pred_check
        _
      $region10: #{_conv_block_impl.2} parent=5 // pred_check_branch
        %161 = sbr.rel (%p158) target = $region12
      $region11: #{_conv_block_impl.2} parent=5 // pred_region
        %s162 = ssub.s32 %s12, 1
        // Predicated region
        $region13: #{_conv_block_impl.2} parent=11 // pred_check
          %p163 = pneg %p59
        $region14: #{_conv_block_impl.2} parent=11 // pred_check_branch
          %165 = sbr.rel (%p163) target = $region16
        $region15: #{_conv_block_impl.2} parent=11 // pred_region
          _
        $region16: #{_conv_block_impl.2} parent=11 // pred_fallthru
          _
        // Predicated region
        $region17: #{_conv_block_impl.2} parent=11 // pred_check
          %p166 = pneg %p80
        $region18: #{_conv_block_impl.2} parent=11 // pred_check_branch
          %168 = sbr.rel (%p166) target = $region20
        $region19: #{_conv_block_impl.2} parent=11 // pred_region
          _
        $region20: #{_conv_block_impl.2} parent=11 // pred_fallthru
          _
      $region12: #{_conv_block_impl.2} parent=5 // pred_fallthru
        _
      %p169 = scmp.lt.s32.totalorder %s12, 4
      // Predicated region
      $region21: #{_conv_block_impl.2} parent=5 // pred_check
        %p170 = pneg %p169
      $region22: #{_conv_block_impl.2} parent=5 // pred_check_branch
        %172 = sbr.rel (%p170) target = $region24
      $region23: #{_conv_block_impl.2} parent=5 // pred_region
        // Predicated region
        $region25: #{_conv_block_impl.2} parent=23 // pred_check
          %p173 = pneg %p32
        $region26: #{_conv_block_impl.2} parent=23 // pred_check_branch
          %175 = sbr.rel (%p173) target = $region28
        $region27: #{_conv_block_impl.2} parent=23 // pred_region
          %s176 = sand.u32 %s22, 1
          %s177 = sand.u32 %s22, 1
          %s178 = smul.addr %s177, 20
          %s179 = scalar_lea.vmem [#allocation2], %s178
          %s180 = smul.addr %s12, 4
          %s181 = scalar_lea.vmem %s0, %s180
          // Predicated region
          $region29: #{_conv_block_impl.2} parent=27 // pred_check
            _
          $region30: #{_conv_block_impl.2} parent=27 // pred_check_branch
            %183 = sbr.rel (0) target = $region32
          $region31: #{_conv_block_impl.2} parent=27 // pred_region
            // Predicated region
            $region33: #{_conv_block_impl.2} parent=31 // pred_check
              _
            $region34: #{_conv_block_impl.2} parent=31 // pred_check_branch
              %185 = sbr.rel target = $region36
            $region35: #{_conv_block_impl.2} parent=31 // pred_region
              // Predicated region
              $region48: #{_conv_block_impl.2} parent=35 // pred_check
                _
              $region49: #{_conv_block_impl.2} parent=35 // pred_check_branch
                %209 = sbr.rel (0) target = $region51
              $region50: #{_conv_block_impl.2} parent=35 // pred_region
                loop: start=0, step=1, limit=1
                $region52: #{_conv_block_impl.2} parent=50 // loop_pre_header
                  _
                $region53: #{_conv_block_impl.2} parent=50 // loop_header
                  %s211 = sphi 0, %s215
                  %p212 = scmp.ge.s32.totalorder %s211, 1
                  %s216 = sphi %s181, %s181
                  %s217 = sphi %s179, %s179
                $region54: #{_conv_block_impl.2} parent=50 // loop_header_branch
                  %214 = sbr.rel (%p212) target = $region58
                $region55: #{_conv_block_impl.2} parent=50 // loop_body
                  _
                $region56: #{_conv_block_impl.2} parent=50 // loop_footer
                  %s215 = sadd.s32 1, %s211
                $region57: #{_conv_block_impl.2} parent=50 // loop_footer_branch
                  %210 = sbr.rel target = $region53
                $region58: #{_conv_block_impl.2} parent=50 // loop_exit
                  _
                %s219 = ssub.s32 16, 1
                loop: start=0, step=1, limit=1
                $region59: #{_conv_block_impl.2} parent=50 // loop_pre_header
                  _
                $region60: #{_conv_block_impl.2} parent=50 // loop_header
                  %s221 = sphi 0, %s225
                  %p222 = scmp.ge.s32.totalorder %s221, 1
                  %s226 = sphi %s181, %s181
                  %s227 = sphi %s179, %s179
                $region61: #{_conv_block_impl.2} parent=50 // loop_header_branch
                  %224 = sbr.rel (%p222) target = $region65
                $region62: #{_conv_block_impl.2} parent=50 // loop_body
                  %v228 = vld [vmem:[%s226] sm:%s219]
                  %229 = vst [vmem:[%s227] sm:%s219] %v228
                  %v230 = vld [vmem:[%s226 + $0x10] sm:%s219]
                  %231 = vst [vmem:[%s227 + $0x4] sm:%s219] %v230
                  %v232 = vld [vmem:[%s226 + $0x20] sm:%s219]
                  %233 = vst [vmem:[%s227 + $0x8] sm:%s219] %v232
                  %v234 = vld [vmem:[%s226 + $0x30] sm:%s219]
                  %235 = vst [vmem:[%s227 + $0xc] sm:%s219] %v234
                  %v236 = vld [vmem:[%s226 + $0x40] sm:%s219]
                  %237 = vst [vmem:[%s227 + $0x10] sm:%s219] %v236
                $region63: #{_conv_block_impl.2} parent=50 // loop_footer
                  %s225 = sadd.s32 1, %s221
                $region64: #{_conv_block_impl.2} parent=50 // loop_footer_branch
                  %220 = sbr.rel target = $region60
                $region65: #{_conv_block_impl.2} parent=50 // loop_exit
                  _
              $region51: #{_conv_block_impl.2} parent=35 // pred_fallthru
                _
            $region36: #{_conv_block_impl.2} parent=31 // pred_fallthru
              _
            // Predicated region
            $region37: #{_conv_block_impl.2} parent=31 // pred_check
              _
            $region38: #{_conv_block_impl.2} parent=31 // pred_check_branch
              %187 = sbr.rel (0) target = $region40
            $region39: #{_conv_block_impl.2} parent=31 // pred_region
              %s189 = ssub.s32 16, 1
              loop: start=0, step=1, limit=1
              $region41: #{_conv_block_impl.2} parent=39 // loop_pre_header
                _
              $region42: #{_conv_block_impl.2} parent=39 // loop_header
                %s191 = sphi 0, %s195
                %p192 = scmp.ge.s32.totalorder %s191, 1
                %s196 = sphi %s181, %s181
                %s197 = sphi %s179, %s179
              $region43: #{_conv_block_impl.2} parent=39 // loop_header_branch
                %194 = sbr.rel (%p192) target = $region47
              $region44: #{_conv_block_impl.2} parent=39 // loop_body
                %v198 = vld [vmem:[%s196] sm:%s189]
                %199 = vst [vmem:[%s197] sm:%s189] %v198
                %v200 = vld [vmem:[%s196 + $0x10] sm:%s189]
                %201 = vst [vmem:[%s197 + $0x4] sm:%s189] %v200
                %v202 = vld [vmem:[%s196 + $0x20] sm:%s189]
                %203 = vst [vmem:[%s197 + $0x8] sm:%s189] %v202
                %v204 = vld [vmem:[%s196 + $0x30] sm:%s189]
                %205 = vst [vmem:[%s197 + $0xc] sm:%s189] %v204
                %v206 = vld [vmem:[%s196 + $0x40] sm:%s189]
                %207 = vst [vmem:[%s197 + $0x10] sm:%s189] %v206
              $region45: #{_conv_block_impl.2} parent=39 // loop_footer
                %s195 = sadd.s32 1, %s191
              $region46: #{_conv_block_impl.2} parent=39 // loop_footer_branch
                %190 = sbr.rel target = $region42
              $region47: #{_conv_block_impl.2} parent=39 // loop_exit
                _
            $region40: #{_conv_block_impl.2} parent=31 // pred_fallthru
              _
          $region32: #{_conv_block_impl.2} parent=27 // pred_fallthru
            _
          %238 = vnop
        $region28: #{_conv_block_impl.2} parent=23 // pred_fallthru
          _
      $region24: #{_conv_block_impl.2} parent=5 // pred_fallthru
        _
      %p239 = scmp.le.s32.totalorder 1, %s12
      %p240 = scmp.lt.s32.totalorder %s12, 5
      %p241 = pnand %p239, %p240
      %p242 = pneg %p241
      // Predicated region
      $region66: #{_conv_block_impl.2} parent=5 // pred_check
        _
      $region67: #{_conv_block_impl.2} parent=5 // pred_check_branch
        %244 = sbr.rel (%p241) target = $region69
      $region68: #{_conv_block_impl.2} parent=5 // pred_region
        %s245 = ssub.s32 %s12, 1
        %s246 = sand.u32 %s25, 1
        %s247 = sand.u32 %s25, 1
        %s248 = smul.addr %s247, 20
        %s249 = scalar_lea.vmem [#allocation2], %s248
        // Predicated region
        $region70: #{_conv_block_impl.2} parent=68 // pred_check
          %p250 = pneg %p38
        $region71: #{_conv_block_impl.2} parent=68 // pred_check_branch
          %252 = sbr.rel (%p250) target = $region73
        $region72: #{_conv_block_impl.2} parent=68 // pred_region
          _
        $region73: #{_conv_block_impl.2} parent=68 // pred_fallthru
          _
        %s253 = sand.u32 %s25, 1
        %s254 = sand.u32 %s25, 1
        %s255 = smul.addr %s254, 20
        %s256 = scalar_lea.vmem [#allocation2], %s255
        %p257 = pneg %p38
        %p258 = pneg %p35
        %p259 = pneg %p59
        %p260 = pneg %p56
        %p261 = pneg %p80
        %p262 = pneg %p77
        %p263 = pneg %p106
        %p264 = pneg %p103
        %p265 = scmp.lt.s32.totalorder %s17, 3
        %s266 = scalar_select %p265, %s17, 3
        %s267 = smul.addr %s266, 8
        %s268 = scalar_lea.vmem %s3, %s267
        %p269 = pneg %p127
        %p270 = pneg %p124
        %p271 = pneg %p148
        %p272 = pneg %p145
        %p273 = scmp.lt.s32.totalorder %s17, 3
        %s274 = scalar_select %p273, %s17, 3
        %s275 = smul.addr %s274, 8
        %s276 = scalar_lea.vmem %s3, %s275
        %p278 = scmp.eq.s32.totalorder %s17, 0
        // Predicated region
        $region74: #{_conv_block_impl.2} parent=68 // pred_check
          %p279 = pneg %p278
        $region75: #{_conv_block_impl.2} parent=68 // pred_check_branch
          %281 = sbr.rel (%p279) target = $region77
        $region76: #{_conv_block_impl.2} parent=68 // pred_region
          %vm282 = vcmask 7168
          %283 = vst.msk [vmem:[%s4] sm:$0xff] %vm282, 0.0
          %284 = vst.msk [vmem:[%s5] sm:$0xff] %vm282, 0.0
        $region77: #{_conv_block_impl.2} parent=68 // pred_fallthru
          _
        %v285 = vld [vmem:[%s1] sm:$0xf]
        %v286 = vld [vmem:[%s249] sm:$0xf]
        %v287 = vld [vmem:[%s249 + $0x4] sm:$0xf]
        %v288 = vld [vmem:[%s249 + $0x8] sm:$0xf]
        %v289 = vld [vmem:[%s249 + $0xc] sm:$0xf]
        %v290 = vld [vmem:[%s249 + $0x10] sm:$0x3]
        %v291 = vld [vmem:[%s2] sm:$0xff]
        %293 = vset.pattern.permute.xlu0 0
        %294 = vperm.xlu0 %293, %v291
        %v295 = vpop.permute.xlu0 %294
        %v302 = vunpack.c.l.b16 %v286
        %v303 = vunpack.c.l.b16 %v287
        %v304 = vunpack.c.l.b16 %v288
        %v305 = vunpack.c.l.b16 %v289
        %v306 = vunpack.c.l.b16 %v290
        %v307 = vpack.c.b16 %v303, %v302
        %v308 = vpack.c.b16 %v305, %v304
        %v309 = vpack.c.b16 %v306, %v306
        %vm312 = vcmask 293888
        %v314 = vsel %vm312, %v285, 0
        %vm316 = vcmask 1041408
        %v318 = vsel %vm316, %v309, 0
        %320 = vmatpush.bf16.msra.mxu0 0
        %321 = vmatpush.bf16.msra.mxu0 0
        %322 = vmatpush.bf16.msra.mxu0 0
        %323 = vmatpush.bf16.msra.mxu0 0
        %324 = vmatpush.bf16.msra.mxu0 0
        %325 = vmatpush.bf16.msra.mxu0 %v318
        %326 = vmatpush.bf16.msra.mxu0 %v308
        %327 = vmatpush.bf16.msra.mxu0 %v307
        %328 = vmatmul.bf16.gmra.mxu0 %v314
        %v329 = vpop.f32.mrf.mxu0
        %v330 = vadd.f32 %v295, %v329
        %v331 = vpop.f32.mrf.mxu0
        %332 = vdwg.mxu0
        %333 = vst [vmem:[%s276] sm:$0xff] %v330
        %v334 = vlaneseq
        %v335 = vand.u32 %v334, 127
        %s336 = smul.u32 %s17, 128
        %v337 = vstv %s336
        %v338 = vadd.s32 %v335, %v337
        %vm339 = vcmp.lt.s32.totalorder %v338, 392
        %v340 = vsel %vm339, %v330, 0.0
        %v341 = vld [vmem:[%s4] sm:$0xff]
        %342 = vadd.xlane.f32.xlu0 %v340
        %v343 = vpop.xlane.xlu0 %342
        %v344 = vadd.f32 %v341, %v343
        %vm345 = vcmask 7168
        %346 = vst.msk [vmem:[%s4] sm:$0xff] %vm345, %v344
        %v347 = vld [vmem:[%s5] sm:$0xff]
        %v348 = vmul.f32 %v340, %v340
        %349 = vadd.xlane.f32.xlu0 %v348
        %v350 = vpop.xlane.xlu0 %349
        %v351 = vadd.f32 %v347, %v350
        %352 = vst.msk [vmem:[%s5] sm:$0xff] %vm345, %v351
        %p353 = scmp.lt.s32.totalorder %s17, 3
        %s354 = scalar_select %p353, %s17, 3
        %s355 = smul.addr %s354, 8
        %s356 = scalar_lea.vmem %s3, %s355
        // Predicated region
        $region78: #{_conv_block_impl.2} parent=68 // pred_check
          %p357 = pneg %p103
        $region79: #{_conv_block_impl.2} parent=68 // pred_check_branch
          %359 = sbr.rel (%p357) target = $region81
        $region80: #{_conv_block_impl.2} parent=68 // pred_region
          _
        $region81: #{_conv_block_impl.2} parent=68 // pred_fallthru
          _
        // Predicated region
        $region82: #{_conv_block_impl.2} parent=68 // pred_check
          %p360 = pneg %p124
        $region83: #{_conv_block_impl.2} parent=68 // pred_check_branch
          %362 = sbr.rel (%p360) target = $region85
        $region84: #{_conv_block_impl.2} parent=68 // pred_region
          _
        $region85: #{_conv_block_impl.2} parent=68 // pred_fallthru
          _
        // Predicated region
        $region86: #{_conv_block_impl.2} parent=68 // pred_check
          %p363 = pneg %p145
        $region87: #{_conv_block_impl.2} parent=68 // pred_check_branch
          %365 = sbr.rel (%p363) target = $region89
        $region88: #{_conv_block_impl.2} parent=68 // pred_region
          _
        $region89: #{_conv_block_impl.2} parent=68 // pred_fallthru
          _
        // Predicated region
        $region90: #{_conv_block_impl.2} parent=68 // pred_check
          %p366 = pneg %p124
        $region91: #{_conv_block_impl.2} parent=68 // pred_check_branch
          %368 = sbr.rel (%p366) target = $region93
        $region92: #{_conv_block_impl.2} parent=68 // pred_region
          _
        $region93: #{_conv_block_impl.2} parent=68 // pred_fallthru
          _
        // Predicated region
        $region94: #{_conv_block_impl.2} parent=68 // pred_check
          %p369 = pneg %p145
        $region95: #{_conv_block_impl.2} parent=68 // pred_check_branch
          %371 = sbr.rel (%p369) target = $region97
        $region96: #{_conv_block_impl.2} parent=68 // pred_region
          _
        $region97: #{_conv_block_impl.2} parent=68 // pred_fallthru
          _
      $region69: #{_conv_block_impl.2} parent=5 // pred_fallthru
        _
      %p372 = scmp.le.s32.totalorder 2, %s12
      // Predicated region
      $region98: #{_conv_block_impl.2} parent=5 // pred_check
        %p373 = pneg %p372
      $region99: #{_conv_block_impl.2} parent=5 // pred_check_branch
        %375 = sbr.rel (%p373) target = $region101
      $region100: #{_conv_block_impl.2} parent=5 // pred_region
        %s376 = ssub.s32 %s12, 2
        // Predicated region
        $region102: #{_conv_block_impl.2} parent=100 // pred_check
          %p377 = pneg %p109
        $region103: #{_conv_block_impl.2} parent=100 // pred_check_branch
          %379 = sbr.rel (%p377) target = $region105
        $region104: #{_conv_block_impl.2} parent=100 // pred_region
          %p380 = scmp.lt.s32.totalorder %s18, 3
          %s381 = scalar_select %p380, %s18, 3
          %s382 = smul.addr %s381, 8
          %s383 = scalar_lea.vmem %s3, %s382
        $region105: #{_conv_block_impl.2} parent=100 // pred_fallthru
          _
      $region101: #{_conv_block_impl.2} parent=5 // pred_fallthru
        _
    $region6: #{_conv_block_impl.2} parent=1 // loop_footer
      %s16 = sadd.s32 1, %s12
    $region7: #{_conv_block_impl.2} parent=1 // loop_footer_branch
      %11 = sbr.rel target = $region3
    $region8: #{_conv_block_impl.2} parent=1 // loop_exit
      _

// kernel: _conv_block_impl.3
$region0: #{_conv_block_impl.3}
  #allocation0 [shape = 'u32[]', space=smem, size = 0x4, offset = 0x4, fixed_abs, tag = 'smem constant byte address 0x4 - core index']
  #allocation1 [shape = 'u32[72,128]{1,0:T(1,128)}', space=vmem, size = 0x9000, scoped, tag = 'internal scratch']
  %s0 = inlined_call_operand.vmem [shape: f32[8,512], index: 0, kind: input, shape index: {}, may-alias: {0,5}]
  %s1 = inlined_call_operand.vmem [shape: f32[8,1], index: 1, kind: input, shape index: {}]
  %s2 = inlined_call_operand.vmem [shape: f32[8,1], index: 2, kind: input, shape index: {}]
  %s3 = inlined_call_operand.vmem [shape: f32[8,1], index: 3, kind: input, shape index: {}]
  %s4 = inlined_call_operand.vmem [shape: f32[8,1], index: 4, kind: input, shape index: {}]
  %s5 = inlined_call_operand.vmem [shape: f32[8,512], index: 5, kind: output, shape index: {}, may-alias: {0,5}]
  %s6 = sld [smem:[#allocation0]]
  $region53: #{_conv_block_impl.3} parent=0
    _
  %s8 = ssub.s32 1, %s6
  %s9 = scalar_select 0, %s8, %s6
  loop: start=0, step=1, limit=6
  $region2: #{_conv_block_impl.3} parent=0 // loop_pre_header
    _
  $region3: #{_conv_block_impl.3} parent=0 // loop_header
    %s11 = sphi 0, %s15
    %p12 = scmp.ge.s32.totalorder %s11, 6
    %s21 = sphi 0, %s23
    %s24 = sphi 0, %s21
    %s25 = sphi 0, %s24
    %s41 = sphi 0, %s25
    %s45 = sphi 0, %s45
    %s47 = sphi 0, %s45
    %s48 = sphi 0, %s47
    %s62 = sphi 0, %s48
    %s66 = sphi 0, %s66
    %s68 = sphi 0, %s66
    %s69 = sphi 0, %s68
    %s83 = sphi 0, %s69
    %s87 = sphi 0, %s87
    %s89 = sphi 0, %s87
    %s90 = sphi 0, %s89
    %s104 = sphi 0, %s90
    %s108 = sphi 0, %s108
    %s110 = sphi 0, %s108
    %s111 = sphi 0, %s110
    %s125 = sphi 0, %s111
    %s131 = sphi 0, %s133
    %s134 = sphi 0, %s131
    %s135 = sphi 0, %s134
    %s151 = sphi 0, %s135
  $region4: #{_conv_block_impl.3} parent=0 // loop_header_branch
    %14 = sbr.rel (%p12) target = $region8
  $region5: #{_conv_block_impl.3} parent=0 // loop_body
    %s16 = ssub.s32 %s11, 1
    %s17 = ssub.s32 %s11, 2
    %s18 = sadd.s32 %s11, 1
    %s19 = ssub.s32 %s11, %s18
    %p20 = scmp.eq.s32.totalorder %s19, 0
    %s22 = sadd.s32 %s21, 1
    %s23 = scalar_select %p20, %s21, %s22
    %p26 = pneg %p20
    %p27 = scmp.eq.s32.totalorder %s11, 3
    %p28 = por %p26, %p27
    %p29 = scmp.ne.s32.totalorder %s21, %s24
    %p30 = scmp.eq.s32.totalorder %s11, 0
    %p31 = por %p29, %p30
    %p32 = scmp.ne.s32.totalorder %s21, %s24
    %p33 = scmp.eq.s32.totalorder %s16, 3
    %p34 = por %p32, %p33
    %p35 = scmp.ne.s32.totalorder %s24, %s25
    %p36 = scmp.eq.s32.totalorder %s16, 0
    %p37 = por %p35, %p36
    %p38 = scmp.ne.s32.totalorder %s24, %s25
    %p39 = scmp.eq.s32.totalorder %s17, 3
    %p40 = por %p38, %p39
    %p42 = scmp.ne.s32.totalorder %s25, %s41
    %p43 = scmp.eq.s32.totalorder %s17, 0
    %p44 = por %p42, %p43
    %s46 = sadd.s32 %s45, 1
    %p49 = scmp.eq.s32.totalorder %s11, 3
    %p50 = scmp.ne.s32.totalorder %s45, %s47
    %p51 = scmp.eq.s32.totalorder %s11, 0
    %p52 = por %p50, %p51
    %p53 = scmp.ne.s32.totalorder %s45, %s47
    %p54 = scmp.eq.s32.totalorder %s16, 3
    %p55 = por %p53, %p54
    %p56 = scmp.ne.s32.totalorder %s47, %s48
    %p57 = scmp.eq.s32.totalorder %s16, 0
    %p58 = por %p56, %p57
    %p59 = scmp.ne.s32.totalorder %s47, %s48
    %p60 = scmp.eq.s32.totalorder %s17, 3
    %p61 = por %p59, %p60
    %p63 = scmp.ne.s32.totalorder %s48, %s62
    %p64 = scmp.eq.s32.totalorder %s17, 0
    %p65 = por %p63, %p64
    %s67 = sadd.s32 %s66, 1
    %p70 = scmp.eq.s32.totalorder %s11, 3
    %p71 = scmp.ne.s32.totalorder %s66, %s68
    %p72 = scmp.eq.s32.totalorder %s11, 0
    %p73 = por %p71, %p72
    %p74 = scmp.ne.s32.totalorder %s66, %s68
    %p75 = scmp.eq.s32.totalorder %s16, 3
    %p76 = por %p74, %p75
    %p77 = scmp.ne.s32.totalorder %s68, %s69
    %p78 = scmp.eq.s32.totalorder %s16, 0
    %p79 = por %p77, %p78
    %p80 = scmp.ne.s32.totalorder %s68, %s69
    %p81 = scmp.eq.s32.totalorder %s17, 3
    %p82 = por %p80, %p81
    %p84 = scmp.ne.s32.totalorder %s69, %s83
    %p85 = scmp.eq.s32.totalorder %s17, 0
    %p86 = por %p84, %p85
    %s88 = sadd.s32 %s87, 1
    %p91 = scmp.eq.s32.totalorder %s11, 3
    %p92 = scmp.ne.s32.totalorder %s87, %s89
    %p93 = scmp.eq.s32.totalorder %s11, 0
    %p94 = por %p92, %p93
    %p95 = scmp.ne.s32.totalorder %s87, %s89
    %p96 = scmp.eq.s32.totalorder %s16, 3
    %p97 = por %p95, %p96
    %p98 = scmp.ne.s32.totalorder %s89, %s90
    %p99 = scmp.eq.s32.totalorder %s16, 0
    %p100 = por %p98, %p99
    %p101 = scmp.ne.s32.totalorder %s89, %s90
    %p102 = scmp.eq.s32.totalorder %s17, 3
    %p103 = por %p101, %p102
    %p105 = scmp.ne.s32.totalorder %s90, %s104
    %p106 = scmp.eq.s32.totalorder %s17, 0
    %p107 = por %p105, %p106
    %s109 = sadd.s32 %s108, 1
    %p112 = scmp.eq.s32.totalorder %s11, 3
    %p113 = scmp.ne.s32.totalorder %s108, %s110
    %p114 = scmp.eq.s32.totalorder %s11, 0
    %p115 = por %p113, %p114
    %p116 = scmp.ne.s32.totalorder %s108, %s110
    %p117 = scmp.eq.s32.totalorder %s16, 3
    %p118 = por %p116, %p117
    %p119 = scmp.ne.s32.totalorder %s110, %s111
    %p120 = scmp.eq.s32.totalorder %s16, 0
    %p121 = por %p119, %p120
    %p122 = scmp.ne.s32.totalorder %s110, %s111
    %p123 = scmp.eq.s32.totalorder %s17, 3
    %p124 = por %p122, %p123
    %p126 = scmp.ne.s32.totalorder %s111, %s125
    %p127 = scmp.eq.s32.totalorder %s17, 0
    %p128 = por %p126, %p127
    %s129 = ssub.s32 %s11, %s18
    %p130 = scmp.eq.s32.totalorder %s129, 0
    %s132 = sadd.s32 %s131, 1
    %s133 = scalar_select %p130, %s131, %s132
    %p136 = pneg %p130
    %p137 = scmp.eq.s32.totalorder %s11, 3
    %p138 = por %p136, %p137
    %p139 = scmp.ne.s32.totalorder %s131, %s134
    %p140 = scmp.eq.s32.totalorder %s11, 0
    %p141 = por %p139, %p140
    %p142 = scmp.ne.s32.totalorder %s131, %s134
    %p143 = scmp.eq.s32.totalorder %s16, 3
    %p144 = por %p142, %p143
    %p145 = scmp.ne.s32.totalorder %s134, %s135
    %p146 = scmp.eq.s32.totalorder %s16, 0
    %p147 = por %p145, %p146
    %p148 = scmp.ne.s32.totalorder %s134, %s135
    %p149 = scmp.eq.s32.totalorder %s17, 3
    %p150 = por %p148, %p149
    %p152 = scmp.ne.s32.totalorder %s135, %s151
    %p153 = scmp.eq.s32.totalorder %s17, 0
    %p154 = por %p152, %p153
    %p155 = scmp.le.s32.totalorder 1, %s11
    %p156 = scmp.lt.s32.totalorder %s11, 5
    %p157 = pnand %p155, %p156
    %p158 = pneg %p157
    // Predicated region
    $region9: #{_conv_block_impl.3} parent=5 // pred_check
      _
    $region10: #{_conv_block_impl.3} parent=5 // pred_check_branch
      %160 = sbr.rel (%p157) target = $region12
    $region11: #{_conv_block_impl.3} parent=5 // pred_region
      %s161 = ssub.s32 %s11, 1
      // Predicated region
      $region13: #{_conv_block_impl.3} parent=11 // pred_check
        %p162 = pneg %p58
      $region14: #{_conv_block_impl.3} parent=11 // pred_check_branch
        %164 = sbr.rel (%p162) target = $region16
      $region15: #{_conv_block_impl.3} parent=11 // pred_region
        _
      $region16: #{_conv_block_impl.3} parent=11 // pred_fallthru
        _
      // Predicated region
      $region17: #{_conv_block_impl.3} parent=11 // pred_check
        %p165 = pneg %p79
      $region18: #{_conv_block_impl.3} parent=11 // pred_check_branch
        %167 = sbr.rel (%p165) target = $region20
      $region19: #{_conv_block_impl.3} parent=11 // pred_region
        _
      $region20: #{_conv_block_impl.3} parent=11 // pred_fallthru
        _
      // Predicated region
      $region21: #{_conv_block_impl.3} parent=11 // pred_check
        %p168 = pneg %p100
      $region22: #{_conv_block_impl.3} parent=11 // pred_check_branch
        %170 = sbr.rel (%p168) target = $region24
      $region23: #{_conv_block_impl.3} parent=11 // pred_region
        _
      $region24: #{_conv_block_impl.3} parent=11 // pred_fallthru
        _
      // Predicated region
      $region25: #{_conv_block_impl.3} parent=11 // pred_check
        %p171 = pneg %p121
      $region26: #{_conv_block_impl.3} parent=11 // pred_check_branch
        %173 = sbr.rel (%p171) target = $region28
      $region27: #{_conv_block_impl.3} parent=11 // pred_region
        _
      $region28: #{_conv_block_impl.3} parent=11 // pred_fallthru
        _
    $region12: #{_conv_block_impl.3} parent=5 // pred_fallthru
      _
    %p174 = scmp.lt.s32.totalorder %s11, 4
    // Predicated region
    $region29: #{_conv_block_impl.3} parent=5 // pred_check
      %p175 = pneg %p174
    $region30: #{_conv_block_impl.3} parent=5 // pred_check_branch
      %177 = sbr.rel (%p175) target = $region32
    $region31: #{_conv_block_impl.3} parent=5 // pred_region
      // Predicated region
      $region33: #{_conv_block_impl.3} parent=31 // pred_check
        %p178 = pneg %p31
      $region34: #{_conv_block_impl.3} parent=31 // pred_check_branch
        %180 = sbr.rel (%p178) target = $region36
      $region35: #{_conv_block_impl.3} parent=31 // pred_region
        %p181 = scmp.lt.s32.totalorder %s11, 3
        %s182 = scalar_select %p181, %s11, 3
        %s183 = smul.addr %s182, 8
        %s184 = scalar_lea.vmem %s0, %s183
      $region36: #{_conv_block_impl.3} parent=31 // pred_fallthru
        _
    $region32: #{_conv_block_impl.3} parent=5 // pred_fallthru
      _
    %p185 = scmp.le.s32.totalorder 1, %s11
    %p186 = scmp.lt.s32.totalorder %s11, 5
    %p187 = pnand %p185, %p186
    %p188 = pneg %p187
    // Predicated region
    $region37: #{_conv_block_impl.3} parent=5 // pred_check
      _
    $region38: #{_conv_block_impl.3} parent=5 // pred_check_branch
      %190 = sbr.rel (%p187) target = $region40
    $region39: #{_conv_block_impl.3} parent=5 // pred_region
      %s191 = ssub.s32 %s11, 1
      %p192 = scmp.lt.s32.totalorder %s16, 3
      %s193 = scalar_select %p192, %s16, 3
      %s194 = smul.addr %s193, 8
      %s195 = scalar_lea.vmem %s0, %s194
      %p196 = pneg %p37
      %p197 = pneg %p34
      %p198 = pneg %p58
      %p199 = pneg %p55
      %p200 = pneg %p79
      %p201 = pneg %p76
      %p202 = pneg %p100
      %p203 = pneg %p97
      %p204 = pneg %p121
      %p205 = pneg %p118
      %p206 = pneg %p147
      %p207 = pneg %p144
      %p208 = scmp.lt.s32.totalorder %s16, 3
      %s209 = scalar_select %p208, %s16, 3
      %s210 = smul.addr %s209, 8
      %s211 = scalar_lea.vmem %s5, %s210
      %p212 = scmp.lt.s32.totalorder %s16, 3
      %s213 = scalar_select %p212, %s16, 3
      %s214 = smul.addr %s213, 8
      %s215 = scalar_lea.vmem %s0, %s214
      %p216 = scmp.lt.s32.totalorder %s16, 3
      %s217 = scalar_select %p216, %s16, 3
      %s218 = smul.addr %s217, 8
      %s219 = scalar_lea.vmem %s5, %s218
      %v220 = vld [vmem:[%s1] sm:$0xff]
      %v221 = vmul.f32 %v220, 0.0025510204
      %v222 = vld [vmem:[%s2] sm:$0xff]
      %v223 = vmul.f32 %v222, 0.0025510204
      %v224 = vmul.f32 %v221, %v221
      %v225 = vsub.f32 %v223, %v224
      %v226 = vmax.f32 %v225, 0.0
      %v227 = vld [vmem:[%s3] sm:$0xff]
      %v228 = vadd.f32 %v226, 1e-05
      %v229 = vrsqrt.pop %v228
      %v230 = vmul.f32 %v229, %v228
      %v231 = vmul.f32 %v230, %v229
      %v232 = vmul.f32 0.5, %v231
      %v233 = vsub.f32 1.5, %v232
      %v234 = vmul.f32 %v229, %v233
      %vm235 = vweird.f32 %v228
      %vm236 = vweird.f32 %v229
      %vm237 = vmor %vm235, %vm236
      %v238 = vsel %vm237, %v229, %v234
      %v239 = vmul.f32 %v227, %v238
      %v240 = vld [vmem:[%s4] sm:$0xff]
      %v241 = vmul.f32 %v221, %v239
      %v242 = vsub.f32 %v240, %v241
      %v243 = vld [vmem:[%s215] sm:$0xff]
      %245 = vset.pattern.permute.xlu0 0
      %246 = vperm.xlu0 %245, %v239
      %v247 = vpop.permute.xlu0 %246
      %v249 = vmul.f32 %v243, %v247
      %251 = vset.pattern.permute.xlu0 0
      %252 = vperm.xlu0 %251, %v242
      %v253 = vpop.permute.xlu0 %252
      %v255 = vadd.f32 %v249, %v253
      %v256 = vmax.f32 %v255, 0.0
      %257 = vst [vmem:[%s219] sm:$0xff] %v256
      %p258 = scmp.lt.s32.totalorder %s16, 3
      %s259 = scalar_select %p258, %s16, 3
      %s260 = smul.addr %s259, 8
      %s261 = scalar_lea.vmem %s5, %s260
      // Predicated region
      $region41: #{_conv_block_impl.3} parent=39 // pred_check
        %p262 = pneg %p144
      $region42: #{_conv_block_impl.3} parent=39 // pred_check_branch
        %264 = sbr.rel (%p262) target = $region44
      $region43: #{_conv_block_impl.3} parent=39 // pred_region
        _
      $region44: #{_conv_block_impl.3} parent=39 // pred_fallthru
        _
    $region40: #{_conv_block_impl.3} parent=5 // pred_fallthru
      _
    %p265 = scmp.le.s32.totalorder 2, %s11
    // Predicated region
    $region45: #{_conv_block_impl.3} parent=5 // pred_check
      %p266 = pneg %p265
    $region46: #{_conv_block_impl.3} parent=5 // pred_check_branch
      %268 = sbr.rel (%p266) target = $region48
    $region47: #{_conv_block_impl.3} parent=5 // pred_region
      %s269 = ssub.s32 %s11, 2
      // Predicated region
      $region49: #{_conv_block_impl.3} parent=47 // pred_check
        %p270 = pneg %p150
      $region50: #{_conv_block_impl.3} parent=47 // pred_check_branch
        %272 = sbr.rel (%p270) target = $region52
      $region51: #{_conv_block_impl.3} parent=47 // pred_region
        %p273 = scmp.lt.s32.totalorder %s17, 3
        %s274 = scalar_select %p273, %s17, 3
        %s275 = smul.addr %s274, 8
        %s276 = scalar_lea.vmem %s5, %s275
      $region52: #{_conv_block_impl.3} parent=47 // pred_fallthru
        _
    $region48: #{_conv_block_impl.3} parent=5 // pred_fallthru
      _
  $region6: #{_conv_block_impl.3} parent=0 // loop_footer
    %s15 = sadd.s32 1, %s11
  $region7: #{_conv_block_impl.3} parent=0 // loop_footer_branch
    %10 = sbr.rel target = $region3
  $region8: #{_conv_block_impl.3} parent=0 // loop_exit
    _

</llo_original>
